<compile_context>
chip_gen: v7x
topology: tpu7x:2x2x1
jax: 0.10.0
libtpu: 0.0.40
codegen_flags: <defaults>
</compile_context>

<pallas_src>
import functools

import jax
import jax.numpy as jnp
from jax.experimental import pallas as pl
from jax.experimental.pallas import tpu as pltpu

LANE = 128


def _round_up(x, m):
    return ((x + m - 1) // m) * m


def mlp_kernel(x_ref, w1_ref, b1_ref, w2_ref, b2_ref, w3_ref, b3_ref, o_ref,
               *, n_in_one, n_out_one):
    # Everything is transposed: activations are (features, batch_block) so that
    # batch maps onto the 128-lane axis (lane-dense input DMA, unmasked output
    # stores, no padding of the n_out=1 head).
    xt = x_ref[...]                                            # (n_in, bb)

    # Layer 1: Linear + ReLU   (Dropout -> identity in eval mode)
    if n_in_one:
        # n_in == 1: outer product on the VPU; skip a degenerate K=1 MXU pass.
        h = w1_ref[...] * xt                                   # (h1,1)*(1,bb)
    else:
        h = jnp.dot(w1_ref[...], xt, preferred_element_type=jnp.float32)
    h = jnp.maximum(h + b1_ref[...], 0.0)

    # Layer 2: Linear + ReLU   (Dropout -> identity in eval mode)
    h = jnp.dot(w2_ref[...], h, preferred_element_type=jnp.float32)
    h = jnp.maximum(h + b2_ref[...], 0.0)

    # Layer 3: output head.
    if n_out_one:
        # n_out == 1: weight column multiply (VPU) + sublane reduction (XLU)
        # instead of a 1-row MXU matmul.
        y = jnp.sum(w3_ref[...] * h, axis=0, keepdims=True)    # (1, bb)
    else:
        y = jnp.dot(w3_ref[...], h, preferred_element_type=jnp.float32)
    o_ref[...] = (y + b3_ref[...]).astype(o_ref.dtype)


def mlp_forward(x, w1, b1, w2, b2, w3, b3, *, block_b=None):
    """x: (B, n_in). Weights/biases in PyTorch nn.Linear layout:
    w: (out, in), b: (out,). Returns (B, n_out)."""
    B, n_in = x.shape
    h1 = w1.shape[0]
    h2 = w2.shape[0]
    n_out = w3.shape[0]
    n_in_one = (n_in == 1)
    n_out_one = (n_out == 1)

    # ---- Batch tiling (batch lives on the lane axis, so tiles are lane slabs).
    if block_b is None:
        if B <= LANE:
            block_b = _round_up(B, LANE)                  # single step
        else:
            # >=2 blocks so both v7x TensorCores get work; <=2048 rows per step
            # so per-step HBM traffic amortizes the ~0.35us grid-step overhead.
            block_b = min(2048, _round_up(pl.cdiv(B, 2), LANE))
    block_b = _round_up(block_b, LANE)
    B_p = _round_up(B, block_b)
    num_blocks = B_p // block_b

    # ---- Boundary layout: transpose once in XLA (free for n_in == 1).
    x_t = x.T                                             # (n_in, B)
    if B_p != B:
        x_t = jnp.pad(x_t, ((0, 0), (0, B_p - B)))

    b1c = b1.reshape(h1, 1)
    b2c = b2.reshape(h2, 1)
    b3c = b3.reshape(n_out, 1)
    # Column form of the head weight for the VPU/XLU path (free reshape).
    w3_k = w3.reshape(h2, 1) if n_out_one else w3

    # Single-step grid -> "arbitrary" (no weight duplication across v7x's two
    # TensorCores); multi-step -> "parallel" for megacore sharding.
    semantics = ("arbitrary",) if num_blocks == 1 else ("parallel",)

    weight_bytes = 4 * (h1 * n_in + h1 + h2 * h1 + h2 + n_out * h2 + n_out)
    io_bytes = 4 * block_b * (n_in + n_out)
    act_bytes = 4 * block_b * (h1 + h2)
    vmem_needed = 2 * (io_bytes + weight_bytes) + act_bytes + (1 << 20)
    compiler_kwargs = dict(dimension_semantics=semantics)
    # Threshold at the v5e scoped default (16 MiB, smallest across chips);
    # cap at 48 MiB to leave headroom under v7x's 64 MiB physical VMEM.
    if vmem_needed > (16 << 20):
        compiler_kwargs["vmem_limit_bytes"] = min(vmem_needed, 48 << 20)

    cost = pl.CostEstimate(
        flops=2 * B_p * (n_in * h1 + h1 * h2 + h2 * n_out),
        transcendentals=0,
        bytes_accessed=4 * B_p * (n_in + n_out) + weight_bytes,
    )

    kernel = functools.partial(mlp_kernel, n_in_one=n_in_one, n_out_one=n_out_one)

    out = pl.pallas_call(
        kernel,
        out_shape=jax.ShapeDtypeStruct((n_out, B_p), x.dtype),
        grid_spec=pltpu.PrefetchScalarGridSpec(
            num_scalar_prefetch=0,
            grid=(num_blocks,),
            in_specs=[
                # x^T: full feature dim, tile over the batch (lane) axis.
                pl.BlockSpec((n_in, block_b), lambda i: (0, i)),
                # Weights / biases: whole arrays resident in VMEM.
                # (pl.Buffered(1) / bf16 omitted: <=64 KiB weights, pure noise.)
                pl.BlockSpec((h1, n_in), lambda i: (0, 0)),
                pl.BlockSpec((h1, 1), lambda i: (0, 0)),
                pl.BlockSpec((h2, h1), lambda i: (0, 0)),
                pl.BlockSpec((h2, 1), lambda i: (0, 0)),
                pl.BlockSpec(w3_k.shape, lambda i: (0, 0)),
                pl.BlockSpec((n_out, 1), lambda i: (0, 0)),
            ],
            out_specs=pl.BlockSpec((n_out, block_b), lambda i: (0, i)),
        ),
        compiler_params=pltpu.CompilerParams(**compiler_kwargs),
        cost_estimate=cost,
    )(x_t, w1, b1c, w2, b2c, w3_k, b3c)

    # Strip batch padding and transpose back to (B, n_out).
    return out[:, :B].T


def init_linear(key, fan_in, fan_out):
    """Deterministic PyTorch-style nn.Linear init: U(-1/sqrt(fan_in), +1/sqrt(fan_in)).
    Returns W with PyTorch layout (fan_out, fan_in) and b with shape (fan_out,)."""
    kw, kb = jax.random.split(key)
    bound = 1.0 / jnp.sqrt(jnp.float32(fan_in))
    w = jax.random.uniform(kw, (fan_out, fan_in), jnp.float32, -bound, bound)
    b = jax.random.uniform(kb, (fan_out,), jnp.float32, -bound, bound)
    return w, b


if __name__ == "__main__":
    # Small shapes consistent with the module: scalar-in / scalar-out regression,
    # hidden sizes from the tuned search space.
    B = 64
    n_in, n_hidden1, n_hidden2, n_out = 1, 64, 32, 1

    root = jax.random.PRNGKey(0)
    kx, k1, k2, k3 = jax.random.split(root, 4)

    x = jax.random.normal(kx, (B, n_in), jnp.float32)
    w1, b1 = init_linear(k1, n_in, n_hidden1)
    w2, b2 = init_linear(k2, n_hidden1, n_hidden2)
    w3, b3 = init_linear(k3, n_hidden2, n_out)

    y = mlp_forward(x, w1, b1, w2, b2, w3, b3)
    y = jax.block_until_ready(y)

    # Pure-JAX reference (PyTorch semantics: y = x @ W.T + b), dropout in eval mode.
    h1_ref = jnp.maximum(x @ w1.T + b1, 0.0)
    h2_ref = jnp.maximum(h1_ref @ w2.T + b2, 0.0)
    y_ref = h2_ref @ w3.T + b3

    assert y.shape == (B, n_out)
    assert jnp.allclose(y, y_ref, atol=1e-5, rtol=1e-5), "kernel mismatch vs reference"

    print("KERNEL_OK")
</pallas_src>

<mosaic_0001>
module attributes {stable_mosaic.version = 11 : i64} {
  func.func @mlp_kernel(%arg0: i32, %arg1: memref<1x128xf32, #tpu.memory_space<vmem>>, %arg2: memref<64x1xf32, #tpu.memory_space<vmem>>, %arg3: memref<64x1xf32, #tpu.memory_space<vmem>>, %arg4: memref<32x64xf32, #tpu.memory_space<vmem>>, %arg5: memref<32x1xf32, #tpu.memory_space<vmem>>, %arg6: memref<32x1xf32, #tpu.memory_space<vmem>>, %arg7: memref<1x1xf32, #tpu.memory_space<vmem>>, %arg8: memref<1x128xf32, #tpu.memory_space<vmem>>) attributes {dimension_semantics = [#tpu.dimension_semantics<arbitrary>], iteration_bounds = array<i64: 1>, scalar_prefetch = 0 : i64, scratch_operands = 0 : i64, tpu.core_type = #tpu.core_type<tc>, window_params = [{transform_indices = @transform_0, window_bounds = array<i64: 1, 128>}, {pipeline_mode = #tpu.pipeline_mode<synchronous>, transform_indices = @transform_1, window_bounds = array<i64: 64, 1>}, {pipeline_mode = #tpu.pipeline_mode<synchronous>, transform_indices = @transform_2, window_bounds = array<i64: 64, 1>}, {pipeline_mode = #tpu.pipeline_mode<synchronous>, transform_indices = @transform_3, window_bounds = array<i64: 32, 64>}, {pipeline_mode = #tpu.pipeline_mode<synchronous>, transform_indices = @transform_4, window_bounds = array<i64: 32, 1>}, {pipeline_mode = #tpu.pipeline_mode<synchronous>, transform_indices = @transform_5, window_bounds = array<i64: 32, 1>}, {pipeline_mode = #tpu.pipeline_mode<synchronous>, transform_indices = @transform_6, window_bounds = array<i64: 1, 1>}, {transform_indices = @transform_7, window_bounds = array<i64: 1, 128>}]} {
    %c0 = arith.constant 0 : index
    %c0_0 = arith.constant 0 : index
    %0 = vector.load %arg1[%c0, %c0_0] : memref<1x128xf32, #tpu.memory_space<vmem>>, vector<1x128xf32>
    %c0_1 = arith.constant 0 : index
    %c0_2 = arith.constant 0 : index
    %1 = vector.load %arg2[%c0_1, %c0_2] : memref<64x1xf32, #tpu.memory_space<vmem>>, vector<64x1xf32>
    %2 = vector.broadcast %1 : vector<64x1xf32> to vector<64x128xf32>
    %3 = vector.broadcast %0 : vector<1x128xf32> to vector<64x128xf32>
    %4 = arith.mulf %2, %3 : vector<64x128xf32>
    %c0_3 = arith.constant 0 : index
    %c0_4 = arith.constant 0 : index
    %5 = vector.load %arg3[%c0_3, %c0_4] : memref<64x1xf32, #tpu.memory_space<vmem>>, vector<64x1xf32>
    %6 = vector.broadcast %5 : vector<64x1xf32> to vector<64x128xf32>
    %7 = arith.addf %4, %6 : vector<64x128xf32>
    %cst = arith.constant 0.000000e+00 : f32
    %8 = vector.broadcast %cst : f32 to vector<64x128xf32>
    %9 = arith.maximumf %7, %8 : vector<64x128xf32>
    %c0_5 = arith.constant 0 : index
    %c0_6 = arith.constant 0 : index
    %10 = vector.load %arg4[%c0_5, %c0_6] : memref<32x64xf32, #tpu.memory_space<vmem>>, vector<32x64xf32>
    %cst_7 = arith.constant dense<0.000000e+00> : vector<32x128xf32>
    %11 = tpu.matmul %10, %9, %cst_7 {dimension_numbers = #tpu.dot_dimension_numbers<[1], [0], [0], [1], [0, 0, 1, 1], [], []>} : vector<32x64xf32>, vector<64x128xf32>, vector<32x128xf32> -> vector<32x128xf32>
    %c0_8 = arith.constant 0 : index
    %c0_9 = arith.constant 0 : index
    %12 = vector.load %arg5[%c0_8, %c0_9] : memref<32x1xf32, #tpu.memory_space<vmem>>, vector<32x1xf32>
    %13 = vector.broadcast %12 : vector<32x1xf32> to vector<32x128xf32>
    %14 = arith.addf %11, %13 : vector<32x128xf32>
    %cst_10 = arith.constant 0.000000e+00 : f32
    %15 = vector.broadcast %cst_10 : f32 to vector<32x128xf32>
    %16 = arith.maximumf %14, %15 : vector<32x128xf32>
    %c0_11 = arith.constant 0 : index
    %c0_12 = arith.constant 0 : index
    %17 = vector.load %arg6[%c0_11, %c0_12] : memref<32x1xf32, #tpu.memory_space<vmem>>, vector<32x1xf32>
    %18 = vector.broadcast %17 : vector<32x1xf32> to vector<32x128xf32>
    %19 = arith.mulf %18, %16 : vector<32x128xf32>
    %cst_13 = arith.constant dense<0.000000e+00> : vector<128xf32>
    %20 = vector.multi_reduction <add>, %19, %cst_13 [0] : vector<32x128xf32> to vector<128xf32>
    %21 = vector.shape_cast %20 : vector<128xf32> to vector<1x128xf32>
    %c0_14 = arith.constant 0 : index
    %c0_15 = arith.constant 0 : index
    %22 = vector.load %arg7[%c0_14, %c0_15] : memref<1x1xf32, #tpu.memory_space<vmem>>, vector<1x1xf32>
    %23 = vector.broadcast %22 : vector<1x1xf32> to vector<1x128xf32>
    %24 = arith.addf %21, %23 : vector<1x128xf32>
    %c0_16 = arith.constant 0 : index
    %c0_17 = arith.constant 0 : index
    %25 = vector.load %arg8[%c0_16, %c0_17] : memref<1x128xf32, #tpu.memory_space<vmem>>, vector<1x128xf32>
    tpu.vector_store %arg8[%c0_16, %c0_17], %24 {strides = array<i32>} : memref<1x128xf32, #tpu.memory_space<vmem>>, vector<1x128xf32>,
    return
  }
  func.func @transform_0(%arg0: i32) -> (i32, i32) {
    %c0_i32 = arith.constant 0 : i32
    %c0_i32_0 = arith.constant 0 : i32
    return %c0_i32, %arg0 : i32, i32
  }
  func.func @transform_1(%arg0: i32) -> (i32, i32) {
    %c0_i32 = arith.constant 0 : i32
    %c0_i32_0 = arith.constant 0 : i32
    %c0_i32_1 = arith.constant 0 : i32
    return %c0_i32, %c0_i32_0 : i32, i32
  }
  func.func @transform_2(%arg0: i32) -> (i32, i32) {
    %c0_i32 = arith.constant 0 : i32
    %c0_i32_0 = arith.constant 0 : i32
    %c0_i32_1 = arith.constant 0 : i32
    return %c0_i32, %c0_i32_0 : i32, i32
  }
  func.func @transform_3(%arg0: i32) -> (i32, i32) {
    %c0_i32 = arith.constant 0 : i32
    %c0_i32_0 = arith.constant 0 : i32
    %c0_i32_1 = arith.constant 0 : i32
    return %c0_i32, %c0_i32_0 : i32, i32
  }
  func.func @transform_4(%arg0: i32) -> (i32, i32) {
    %c0_i32 = arith.constant 0 : i32
    %c0_i32_0 = arith.constant 0 : i32
    %c0_i32_1 = arith.constant 0 : i32
    return %c0_i32, %c0_i32_0 : i32, i32
  }
  func.func @transform_5(%arg0: i32) -> (i32, i32) {
    %c0_i32 = arith.constant 0 : i32
    %c0_i32_0 = arith.constant 0 : i32
    %c0_i32_1 = arith.constant 0 : i32
    return %c0_i32, %c0_i32_0 : i32, i32
  }
  func.func @transform_6(%arg0: i32) -> (i32, i32) {
    %c0_i32 = arith.constant 0 : i32
    %c0_i32_0 = arith.constant 0 : i32
    %c0_i32_1 = arith.constant 0 : i32
    return %c0_i32, %c0_i32_0 : i32, i32
  }
  func.func @transform_7(%arg0: i32) -> (i32, i32) {
    %c0_i32 = arith.constant 0 : i32
    %c0_i32_0 = arith.constant 0 : i32
    return %c0_i32, %arg0 : i32, i32
  }
}

</mosaic_0001>

<llo_original>
// kernel: tpu_custom_call.1
$region0: #{tpu_custom_call.1}
  #allocation0 [shape = 'u32[]', space=smem, size = 0x4, offset = 0x4, fixed_abs, tag = 'smem constant byte address 0x4 - core index']
  #allocation1 [shape = 'u32[144,128]{1,0:T(1,128)}', space=vmem, size = 0x12000, scoped, tag = 'internal scratch']
  #allocation2 [shape = 'f32[1,1]{1,0:T(1,128)S(1)}', space=vmem, size = 0x200, scoped, tag = 'scoped memory for tpu_custom_call.1']
  %s0 = inlined_call_operand.vmem [shape: f32[1,128], index: 0, kind: input, shape index: {}]
  %s1 = inlined_call_operand.vmem [shape: f32[64,1], index: 1, kind: input, shape index: {}]
  %s2 = inlined_call_operand.vmem [shape: f32[64,1], index: 2, kind: input, shape index: {}]
  %s3 = inlined_call_operand.vmem [shape: f32[32,64], index: 3, kind: input, shape index: {}]
  %s4 = inlined_call_operand.vmem [shape: f32[32,1], index: 4, kind: input, shape index: {}]
  %s5 = inlined_call_operand.vmem [shape: f32[32,1], index: 5, kind: input, shape index: {}]
  %s6 = inlined_call_operand.<no memory space> [shape: f32[1,1], index: 6, kind: input, shape index: {}]
  %s7 = inlined_call_operand.hbm [shape: f32[1,128], index: 7, kind: output, shape index: {}]
  %s8 = sld [smem:[#allocation0]]
  $region38: #{tpu_custom_call.1} parent=0
    _
  %s10 = ssub.s32 1, %s8
  %s11 = scalar_select 0, %s10, %s8
  %v12 = vstv %s6
  %13 = vst [vmem:[#allocation2] sm:$0x1] %v12
  $region1: #{tpu_custom_call.1} parent=0
    #allocation3 [shape = 'u8[512]{0}', space=vmem, size = 0x400, scoped, tag = 'output window, operand 0, single buffered']
    #allocation4 [shape = 's32[1]{0}', space=sflag, size = 0x4, scoped, tag = 'scoped memory for tpu_custom_call.1']
    %14 = vsyncpa [#allocation4], 0
    // Predicated region
    $region2: #{tpu_custom_call.1} parent=1 // pred_check
      _
    $region3: #{tpu_custom_call.1} parent=1 // pred_check_branch
      %16 = sbr.rel (0) target = $region5
    $region4: #{tpu_custom_call.1} parent=1 // pred_region
      _
    $region5: #{tpu_custom_call.1} parent=1 // pred_fallthru
      _
    // Predicated region
    $region6: #{tpu_custom_call.1} parent=1 // pred_check
      _
    $region7: #{tpu_custom_call.1} parent=1 // pred_check_branch
      %18 = sbr.rel (0) target = $region9
    $region8: #{tpu_custom_call.1} parent=1 // pred_region
      _
    $region9: #{tpu_custom_call.1} parent=1 // pred_fallthru
      _
    // Predicated region
    $region10: #{tpu_custom_call.1} parent=1 // pred_check
      _
    $region11: #{tpu_custom_call.1} parent=1 // pred_check_branch
      %20 = sbr.rel (0) target = $region13
    $region12: #{tpu_custom_call.1} parent=1 // pred_region
      _
    $region13: #{tpu_custom_call.1} parent=1 // pred_fallthru
      _
    // Predicated region
    $region14: #{tpu_custom_call.1} parent=1 // pred_check
      _
    $region15: #{tpu_custom_call.1} parent=1 // pred_check_branch
      %22 = sbr.rel (0) target = $region17
    $region16: #{tpu_custom_call.1} parent=1 // pred_region
      _
    $region17: #{tpu_custom_call.1} parent=1 // pred_fallthru
      _
    // Predicated region
    $region18: #{tpu_custom_call.1} parent=1 // pred_check
      _
    $region19: #{tpu_custom_call.1} parent=1 // pred_check_branch
      %24 = sbr.rel (0) target = $region21
    $region20: #{tpu_custom_call.1} parent=1 // pred_region
      _
    $region21: #{tpu_custom_call.1} parent=1 // pred_fallthru
      _
    // Predicated region
    $region22: #{tpu_custom_call.1} parent=1 // pred_check
      _
    $region23: #{tpu_custom_call.1} parent=1 // pred_check_branch
      %26 = sbr.rel (0) target = $region25
    $region24: #{tpu_custom_call.1} parent=1 // pred_region
      _
    $region25: #{tpu_custom_call.1} parent=1 // pred_fallthru
      _
    // Predicated region
    $region26: #{tpu_custom_call.1} parent=1 // pred_check
      _
    $region27: #{tpu_custom_call.1} parent=1 // pred_check_branch
      %28 = sbr.rel (0) target = $region29
    $region28: #{tpu_custom_call.1} parent=1 // pred_region
      _
    $region29: #{tpu_custom_call.1} parent=1 // pred_fallthru
      _
    %v29 = vld [vmem:[%s0] sm:$0x1]
    %v30 = vld [vmem:[%s1] sm:$0xff]
    %v31 = vld [vmem:[%s1 + $0x8] sm:$0xff]
    %v32 = vld [vmem:[%s1 + $0x10] sm:$0xff]
    %v33 = vld [vmem:[%s1 + $0x18] sm:$0xff]
    %v34 = vld [vmem:[%s1 + $0x20] sm:$0xff]
    %v35 = vld [vmem:[%s1 + $0x28] sm:$0xff]
    %v36 = vld [vmem:[%s1 + $0x30] sm:$0xff]
    %v37 = vld [vmem:[%s1 + $0x38] sm:$0xff]
    %39 = vset.pattern.permute.xlu0 0
    %40 = vperm.xlu0 %39, %v30
    %v41 = vpop.permute.xlu0 %40
    %44 = vset.pattern.permute.xlu0 0
    %45 = vperm.xlu0 %44, %v31
    %v46 = vpop.permute.xlu0 %45
    %49 = vset.pattern.permute.xlu0 0
    %50 = vperm.xlu0 %49, %v32
    %v51 = vpop.permute.xlu0 %50
    %54 = vset.pattern.permute.xlu0 0
    %55 = vperm.xlu0 %54, %v33
    %v56 = vpop.permute.xlu0 %55
    %59 = vset.pattern.permute.xlu0 0
    %60 = vperm.xlu0 %59, %v34
    %v61 = vpop.permute.xlu0 %60
    %64 = vset.pattern.permute.xlu0 0
    %65 = vperm.xlu0 %64, %v35
    %v66 = vpop.permute.xlu0 %65
    %69 = vset.pattern.permute.xlu0 0
    %70 = vperm.xlu0 %69, %v36
    %v71 = vpop.permute.xlu0 %70
    %74 = vset.pattern.permute.xlu0 0
    %75 = vperm.xlu0 %74, %v37
    %v76 = vpop.permute.xlu0 %75
    %v79 = vlaneseq
    %v80 = vshrl.u32 %v79, 7
    %v81 = vsub.s32 0, %v80
    %v82 = vrot.slane %v29, %v81
    %v84 = vmul.f32 %v41, %v82
    %v85 = vmul.f32 %v46, %v82
    %v86 = vmul.f32 %v51, %v82
    %v87 = vmul.f32 %v56, %v82
    %v88 = vmul.f32 %v61, %v82
    %v89 = vmul.f32 %v66, %v82
    %v90 = vmul.f32 %v71, %v82
    %v91 = vmul.f32 %v76, %v82
    %v92 = vld [vmem:[%s2] sm:$0xff]
    %v93 = vld [vmem:[%s2 + $0x8] sm:$0xff]
    %v94 = vld [vmem:[%s2 + $0x10] sm:$0xff]
    %v95 = vld [vmem:[%s2 + $0x18] sm:$0xff]
    %v96 = vld [vmem:[%s2 + $0x20] sm:$0xff]
    %v97 = vld [vmem:[%s2 + $0x28] sm:$0xff]
    %v98 = vld [vmem:[%s2 + $0x30] sm:$0xff]
    %v99 = vld [vmem:[%s2 + $0x38] sm:$0xff]
    %101 = vset.pattern.permute.xlu0 0
    %102 = vperm.xlu0 %101, %v92
    %v103 = vpop.permute.xlu0 %102
    %106 = vset.pattern.permute.xlu0 0
    %107 = vperm.xlu0 %106, %v93
    %v108 = vpop.permute.xlu0 %107
    %111 = vset.pattern.permute.xlu0 0
    %112 = vperm.xlu0 %111, %v94
    %v113 = vpop.permute.xlu0 %112
    %116 = vset.pattern.permute.xlu0 0
    %117 = vperm.xlu0 %116, %v95
    %v118 = vpop.permute.xlu0 %117
    %121 = vset.pattern.permute.xlu0 0
    %122 = vperm.xlu0 %121, %v96
    %v123 = vpop.permute.xlu0 %122
    %126 = vset.pattern.permute.xlu0 0
    %127 = vperm.xlu0 %126, %v97
    %v128 = vpop.permute.xlu0 %127
    %131 = vset.pattern.permute.xlu0 0
    %132 = vperm.xlu0 %131, %v98
    %v133 = vpop.permute.xlu0 %132
    %136 = vset.pattern.permute.xlu0 0
    %137 = vperm.xlu0 %136, %v99
    %v138 = vpop.permute.xlu0 %137
    %v140 = vadd.f32 %v84, %v103
    %v141 = vadd.f32 %v85, %v108
    %v142 = vadd.f32 %v86, %v113
    %v143 = vadd.f32 %v87, %v118
    %v144 = vadd.f32 %v88, %v123
    %v145 = vadd.f32 %v89, %v128
    %v146 = vadd.f32 %v90, %v133
    %v147 = vadd.f32 %v91, %v138
    %v148 = vmax.f32 %v140, 0.0
    %v149 = vmax.f32 %v141, 0.0
    %v150 = vmax.f32 %v142, 0.0
    %v151 = vmax.f32 %v143, 0.0
    %v152 = vmax.f32 %v144, 0.0
    %v153 = vmax.f32 %v145, 0.0
    %v154 = vmax.f32 %v146, 0.0
    %v155 = vmax.f32 %v147, 0.0
    %v156 = vld [vmem:[%s3] sm:$0xff]
    %v157 = vld [vmem:[%s3 + $0x8] sm:$0xff]
    %v158 = vld [vmem:[%s3 + $0x10] sm:$0xff]
    %v159 = vld [vmem:[%s3 + $0x18] sm:$0xff]
    %v160 = vld [vmem:[%s4] sm:$0xff]
    %v161 = vld [vmem:[%s4 + $0x8] sm:$0xff]
    %v162 = vld [vmem:[%s4 + $0x10] sm:$0xff]
    %v163 = vld [vmem:[%s4 + $0x18] sm:$0xff]
    %165 = vset.pattern.permute.xlu0 0
    %166 = vperm.xlu0 %165, %v160
    %v167 = vpop.permute.xlu0 %166
    %170 = vset.pattern.permute.xlu0 0
    %171 = vperm.xlu0 %170, %v161
    %v172 = vpop.permute.xlu0 %171
    %175 = vset.pattern.permute.xlu0 0
    %176 = vperm.xlu0 %175, %v162
    %v177 = vpop.permute.xlu0 %176
    %180 = vset.pattern.permute.xlu0 0
    %181 = vperm.xlu0 %180, %v163
    %v182 = vpop.permute.xlu0 %181
    %vm184 = vcmask 523264
    %v186 = vsel %vm184, %v156, 0
    %v189 = vsel %vm184, %v157, 0
    %v192 = vsel %vm184, %v158, 0
    %v195 = vsel %vm184, %v159, 0
    %197 = vmatprep.subr.mxu0 0.0
    %198 = vmatpush1.msra.mxu0 %v148
    %199 = vmatprep.subr.mxu0 0.0
    %200 = vmatpush1.msra.mxu0 %v149
    %201 = vmatprep.subr.mxu0 0.0
    %202 = vmatpush1.msra.mxu0 %v150
    %203 = vmatprep.subr.mxu0 0.0
    %204 = vmatpush1.msra.mxu0 %v151
    %205 = vmatprep.subr.mxu0 0.0
    %206 = vmatpush1.msra.mxu0 %v152
    %207 = vmatprep.subr.mxu0 0.0
    %208 = vmatpush1.msra.mxu0 %v153
    %209 = vmatprep.subr.mxu0 0.0
    %210 = vmatpush1.msra.mxu0 %v154
    %211 = vmatprep.subr.mxu0 0.0
    %212 = vmatpush1.msra.mxu0 %v155
    %213 = vmatprep.subr.mxu0 0.0
    %214 = vmatpush1.msra.mxu0 0.0
    %215 = vmatprep.subr.mxu0 0.0
    %216 = vmatpush1.msra.mxu0 0.0
    %217 = vmatprep.subr.mxu0 0.0
    %218 = vmatpush1.msra.mxu0 0.0
    %219 = vmatprep.subr.mxu0 0.0
    %220 = vmatpush1.msra.mxu0 0.0
    %221 = vmatprep.subr.mxu0 0.0
    %222 = vmatpush1.msra.mxu0 0.0
    %223 = vmatprep.subr.mxu0 0.0
    %224 = vmatpush1.msra.mxu0 0.0
    %225 = vmatprep.subr.mxu0 0.0
    %226 = vmatpush1.msra.mxu0 0.0
    %227 = vmatprep.subr.mxu0 0.0
    %228 = vmatpush1.msra.mxu0 0.0
    %229 = vmatprep.subr.mxu0 0.0
    %230 = vmatpush1.msra.mxu0 0.0
    %231 = vmatprep.subr.mxu0 0.0
    %232 = vmatpush1.msra.mxu0 0.0
    %233 = vmatprep.subr.mxu0 0.0
    %234 = vmatpush1.msra.mxu0 0.0
    %235 = vmatprep.subr.mxu0 0.0
    %236 = vmatpush1.msra.mxu0 0.0
    %237 = vmatprep.subr.mxu0 0.0
    %238 = vmatpush1.msra.mxu0 0.0
    %239 = vmatprep.subr.mxu0 0.0
    %240 = vmatpush1.msra.mxu0 0.0
    %241 = vmatprep.subr.mxu0 0.0
    %242 = vmatpush1.msra.mxu0 0.0
    %243 = vmatprep.subr.mxu0 0.0
    %244 = vmatpush1.msra.mxu0 0.0
    %245 = vmatprep.subr.mxu0 0.0
    %246 = vmatpush1.msra.mxu0 0.0
    %247 = vmatprep.subr.mxu0 0.0
    %248 = vmatpush1.msra.mxu0 0.0
    %249 = vmatprep.subr.mxu0 0.0
    %250 = vmatpush1.msra.mxu0 0.0
    %251 = vmatprep.subr.mxu0 0.0
    %252 = vmatpush1.msra.mxu0 0.0
    %253 = vmatprep.subr.mxu0 0.0
    %254 = vmatpush1.msra.mxu0 0.0
    %255 = vmatprep.subr.mxu0 0.0
    %256 = vmatpush1.msra.mxu0 0.0
    %257 = vmatprep.subr.mxu0 0.0
    %258 = vmatpush1.msra.mxu0 0.0
    %259 = vmatprep.subr.mxu0 0.0
    %260 = vmatpush1.msra.mxu0 0.0
    %261 = vmatprep.mubr.f32.mxu0 0.0
    %262 = vmatmul.mubr.f32.gmra.mrb[0].mxu0 %v186
    %v263 = vpop.f32.mrb[0].mxu0
    %v264 = vadd.f32 %v167, %v263
    %v265 = vpop.f32.mrb[0].mxu0
    %266 = vmatprep.mubr.f32.mxu0 0.0
    %267 = vmatmul.mubr.f32.gmra.mrb[0].mxu0 %v189
    %v268 = vpop.f32.mrb[0].mxu0
    %v269 = vadd.f32 %v172, %v268
    %v270 = vpop.f32.mrb[0].mxu0
    %271 = vmatprep.mubr.f32.mxu0 0.0
    %272 = vmatmul.mubr.f32.gmra.mrb[0].mxu0 %v192
    %v273 = vpop.f32.mrb[0].mxu0
    %v274 = vadd.f32 %v177, %v273
    %v275 = vpop.f32.mrb[0].mxu0
    %276 = vmatprep.mubr.f32.mxu0 0.0
    %277 = vmatmul.mubr.f32.gmra.mrb[0].mxu0 %v195
    %v278 = vpop.f32.mrb[0].mxu0
    %v279 = vadd.f32 %v182, %v278
    %v280 = vpop.f32.mrb[0].mxu0
    %281 = vdwg.mxu0
    %v282 = vmax.f32 %v264, 0.0
    %v283 = vmax.f32 %v269, 0.0
    %v284 = vmax.f32 %v274, 0.0
    %v285 = vmax.f32 %v279, 0.0
    %v286 = vld [vmem:[%s5] sm:$0xff]
    %v287 = vld [vmem:[%s5 + $0x8] sm:$0xff]
    %v288 = vld [vmem:[%s5 + $0x10] sm:$0xff]
    %v289 = vld [vmem:[%s5 + $0x18] sm:$0xff]
    %291 = vset.pattern.permute.xlu0 0
    %292 = vperm.xlu0 %291, %v286
    %v293 = vpop.permute.xlu0 %292
    %296 = vset.pattern.permute.xlu0 0
    %297 = vperm.xlu0 %296, %v287
    %v298 = vpop.permute.xlu0 %297
    %301 = vset.pattern.permute.xlu0 0
    %302 = vperm.xlu0 %301, %v288
    %v303 = vpop.permute.xlu0 %302
    %306 = vset.pattern.permute.xlu0 0
    %307 = vperm.xlu0 %306, %v289
    %v308 = vpop.permute.xlu0 %307
    %v310 = vmul.f32 %v293, %v282
    %v311 = vmul.f32 %v298, %v283
    %v312 = vmul.f32 %v303, %v284
    %v313 = vmul.f32 %v308, %v285
    %v314 = vadd.f32 %v310, %v311
    %v315 = vadd.f32 %v314, %v312
    %v316 = vadd.f32 %v315, %v313
    %v317 = vrot.slane %v316, 4
    %v318 = vadd.f32 %v316, %v317
    %v319 = vrot.slane %v318, 2
    %v320 = vadd.f32 %v318, %v319
    %v321 = vrot.slane %v320, 1
    %v322 = vadd.f32 %v320, %v321
    %v323 = vld [vmem:[#allocation2] sm:$0x1]
    %325 = vset.pattern.permute.xlu0 0
    %326 = vperm.xlu0 %325, %v323
    %v327 = vpop.permute.xlu0 %326
    %v329 = vlaneseq
    %v330 = vshrl.u32 %v329, 7
    %v331 = vsub.s32 0, %v330
    %v332 = vrot.slane %v327, %v331
    %v333 = vadd.f32 %v322, %v332
    %334 = vst [vmem:[#allocation3] sm:$0x1] %v333
    // Predicated region
    $region30: #{tpu_custom_call.1} parent=1 // pred_check
      _
    $region31: #{tpu_custom_call.1} parent=1 // pred_check_branch
      %336 = sbr.rel (0) target = $region33
    $region32: #{tpu_custom_call.1} parent=1 // pred_region
      %s338 = ssub.s32 16, 16
      %339 = vsyncadd [#allocation4], %s338
      %s341 = sshll.u32 [#allocation3], 4
      %s342 = int_to_ptr.vmem [resolvable:$true] %s341
      %344 = dma.vmem_to_hbm [thread:$0]  %s342, 16, %s7, [#allocation4]
    $region33: #{tpu_custom_call.1} parent=1 // pred_fallthru
      _
    // Predicated region
    $region34: #{tpu_custom_call.1} parent=1 // pred_check
      _
    $region35: #{tpu_custom_call.1} parent=1 // pred_check_branch
      %346 = sbr.rel (0) target = $region37
    $region36: #{tpu_custom_call.1} parent=1 // pred_region
      %347 = dma.done [#allocation4], 16
    $region37: #{tpu_custom_call.1} parent=1 // pred_fallthru
      _
    %348 = vsyncpa [#allocation4], 1

</llo_original>
